<compile_context>
chip_gen: v7x
topology: tpu7x:2x2x1
jax: 0.10.0
libtpu: 0.0.40
codegen_flags: <defaults>
</compile_context>

<pallas_src>
import jax
import jax.numpy as jnp
from jax import lax
from jax.experimental import pallas as pl
from jax.experimental.pallas import tpu as pltpu


_INV_SQRT2 = 0.7071067811865476
_MiB = 1024 * 1024


def _gelu_exact(x):
    # Matches PyTorch / BERT ACT2FN["gelu"]: x * 0.5 * (1 + erf(x / sqrt(2)))
    return x * 0.5 * (1.0 + lax.erf(x * _INV_SQRT2))


def _bert_intermediate_kernel(x_ref, w_ref, b_ref, o_ref):
    # x_ref: (tm, H)   activation row tile (model dtype)
    # w_ref: (H, tn)   pre-transposed weight tile -> canonical [K, N] MXU feed
    # b_ref: (1, tn)   bias tile, f32
    # o_ref: (tm, tn)  output tile, f32
    x = x_ref[...].astype(jnp.float32)        # `.float()` semantics (no-op for f32)
    w = w_ref[...].astype(jnp.float32)
    acc = jnp.dot(x, w, preferred_element_type=jnp.float32)
    acc = acc + b_ref[...]                    # bias broadcast over rows
    o_ref[...] = _gelu_exact(acc).astype(o_ref.dtype)


def _largest_tile(total, max_tile, quantum):
    """Largest multiple of `quantum` that divides `total` and is <= max_tile."""
    if total % quantum != 0:
        return total
    best = quantum
    t = quantum
    while t <= min(max_tile, total):
        if total % t == 0:
            best = t
        t += quantum
    return best


def bert_intermediate(hidden_states, weight, bias, *, tm=512, tn_max=1536):
    """hidden_states: [B, S, H]; weight: [I, H] (nn.Linear layout); bias: [I].

    Returns float32 [B, S, I] reproducing: x.float() -> Linear -> gelu(exact).
    """
    B, S, H = hidden_states.shape
    I = weight.shape[0]
    M = B * S

    x = hidden_states.reshape(M, H)           # free reshape, no cast, no copy
    w_t = weight.T                            # one-time [I, H] -> [H, I]
    b = bias.astype(jnp.float32).reshape(1, I)

    # Row tile: big for MXU occupancy; ragged last tile is masked by Pallas
    # (no wrapper-side pad / slice copies).
    if M <= tm:
        tm = M                                # full dim is always a legal block
    else:
        tm = max(8, (tm // 8) * 8)
    grid_m = pl.cdiv(M, tm)

    x_item = jnp.dtype(x.dtype).itemsize
    w_item = jnp.dtype(w_t.dtype).itemsize

    # Per-generation VMEM budget: v7x = 64 MiB/TC -> ~48 MiB; v5e/v6e = 128 MiB
    # -> ~100 MiB.  Leave headroom for compiler scratch.
    try:
        vmem_cap = int(pltpu.get_tpu_info().vmem_capacity_bytes)
    except Exception:
        vmem_cap = 64 * _MiB                  # conservative (v7x per-TC)
    vmem_limit = max(32 * _MiB, min(vmem_cap - 16 * _MiB, 100 * _MiB))

    # Estimated VMEM for the resident-weight plan: weight single-buffered,
    # activation / output tiles double-buffered, plus slack.
    resident_bytes = (H * I * w_item
                      + 2 * tm * H * x_item
                      + 2 * tm * I * 4
                      + 2 * I * 4
                      + 4 * _MiB)

    if resident_bytes <= vmem_limit:
        # ---- Plan A: whole weight VMEM-resident, 1-D grid over row tiles. ----
        # Constant index_map -> fetched from HBM exactly once; Buffered(1)
        # halves its VMEM footprint (nothing to prefetch for a stationary block).
        grid = (grid_m,)
        in_specs = [
            pl.BlockSpec((tm, H), lambda i: (i, 0)),                    # x rows
            pl.BlockSpec((H, I), lambda i: (0, 0),
                         pipeline_mode=pl.Buffered(1)),                 # weight
            pl.BlockSpec((1, I), lambda i: (0, 0)),                     # bias
        ]
        out_specs = pl.BlockSpec((tm, I), lambda i: (i, 0))
        dim_sem = ("parallel",)
    else:
        # ---- Plan B: weight banded along I; weight axis OUTERMOST so each
        # (H, tn) band is DMA'd once and reused across all row tiles. ----
        tn = _largest_tile(I, tn_max, 128)    # lane-dense, divides I
        grid = (I // tn, grid_m)
        in_specs = [
            pl.BlockSpec((tm, H), lambda j, i: (i, 0)),                 # x rows
            pl.BlockSpec((H, tn), lambda j, i: (0, j)),                 # weight band
            pl.BlockSpec((1, tn), lambda j, i: (0, j)),                 # bias band
        ]
        out_specs = pl.BlockSpec((tm, tn), lambda j, i: (i, j))
        dim_sem = ("parallel", "parallel")

    out = pl.pallas_call(
        _bert_intermediate_kernel,
        out_shape=jax.ShapeDtypeStruct((M, I), jnp.float32),
        grid_spec=pltpu.PrefetchScalarGridSpec(
            num_scalar_prefetch=0,
            grid=grid,
            in_specs=in_specs,
            out_specs=out_specs,
        ),
        compiler_params=pltpu.CompilerParams(
            dimension_semantics=dim_sem,
            vmem_limit_bytes=int(vmem_limit),
        ),
    )(x, w_t, b)

    return out.reshape(B, S, I)


def _reference(hidden_states, weight, bias):
    x = hidden_states.astype(jnp.float32)
    y = jnp.einsum("bsh,ih->bsi", x, weight.astype(jnp.float32)) + bias.astype(jnp.float32)
    return _gelu_exact(y)


if __name__ == "__main__":
    # Small BERT-like config: hidden_size=32, intermediate_size=128
    B, S, H, I = 2, 8, 32, 128

    key = jax.random.PRNGKey(0)
    k_x, k_w, k_b = jax.random.split(key, 3)

    hidden_states = jax.random.normal(k_x, (B, S, H), dtype=jnp.float32)
    # Deterministic init mimicking nn.Linear defaults (uniform in +/- 1/sqrt(H))
    bound = 1.0 / (H ** 0.5)
    weight = jax.random.uniform(k_w, (I, H), minval=-bound, maxval=bound, dtype=jnp.float32)
    bias = jax.random.uniform(k_b, (I,), minval=-bound, maxval=bound, dtype=jnp.float32)

    out = bert_intermediate(hidden_states, weight, bias)
    out = jax.block_until_ready(out)

    ref = _reference(hidden_states, weight, bias)
    assert out.shape == (B, S, I)
    assert jnp.allclose(out, ref, atol=2e-5, rtol=2e-5), "mismatch vs reference"

    print("KERNEL_OK")
</pallas_src>

<mosaic_0001>
module attributes {stable_mosaic.version = 11 : i64} {
  func.func @_bert_intermediate_kernel(%arg0: i32, %arg1: memref<16x32xf32, #tpu.memory_space<vmem>>, %arg2: memref<32x128xf32, #tpu.memory_space<vmem>>, %arg3: memref<1x128xf32, #tpu.memory_space<vmem>>, %arg4: memref<16x128xf32, #tpu.memory_space<vmem>>) attributes {dimension_semantics = [#tpu.dimension_semantics<parallel>], iteration_bounds = array<i64: 1>, scalar_prefetch = 0 : i64, scratch_operands = 0 : i64, tpu.core_type = #tpu.core_type<tc>, window_params = [{transform_indices = @transform_0, window_bounds = array<i64: 16, 32>}, {pipeline_mode = #tpu.pipeline_mode<synchronous>, transform_indices = @transform_1, window_bounds = array<i64: 32, 128>}, {pipeline_mode = #tpu.pipeline_mode<synchronous>, transform_indices = @transform_2, window_bounds = array<i64: 1, 128>}, {transform_indices = @transform_3, window_bounds = array<i64: 16, 128>}]} {
    %c0 = arith.constant 0 : index
    %c0_0 = arith.constant 0 : index
    %0 = vector.load %arg1[%c0, %c0_0] : memref<16x32xf32, #tpu.memory_space<vmem>>, vector<16x32xf32>
    %c0_1 = arith.constant 0 : index
    %c0_2 = arith.constant 0 : index
    %1 = vector.load %arg2[%c0_1, %c0_2] : memref<32x128xf32, #tpu.memory_space<vmem>>, vector<32x128xf32>
    %cst = arith.constant dense<0.000000e+00> : vector<16x128xf32>
    %2 = tpu.matmul %0, %1, %cst {dimension_numbers = #tpu.dot_dimension_numbers<[1], [0], [0], [1], [0, 0, 1, 1], [], []>} : vector<16x32xf32>, vector<32x128xf32>, vector<16x128xf32> -> vector<16x128xf32>
    %c0_3 = arith.constant 0 : index
    %c0_4 = arith.constant 0 : index
    %3 = vector.load %arg3[%c0_3, %c0_4] : memref<1x128xf32, #tpu.memory_space<vmem>>, vector<1x128xf32>
    %4 = vector.broadcast %3 : vector<1x128xf32> to vector<16x128xf32>
    %5 = arith.addf %2, %4 : vector<16x128xf32>
    %cst_5 = arith.constant 5.000000e-01 : f32
    %6 = vector.broadcast %cst_5 : f32 to vector<16x128xf32>
    %7 = arith.mulf %5, %6 : vector<16x128xf32>
    %cst_6 = arith.constant 0.707106769 : f32
    %8 = vector.broadcast %cst_6 : f32 to vector<16x128xf32>
    %9 = arith.mulf %5, %8 : vector<16x128xf32>
    %10 = math.erf %9 : vector<16x128xf32>
    %cst_7 = arith.constant 1.000000e+00 : f32
    %11 = vector.broadcast %cst_7 : f32 to vector<16x128xf32>
    %12 = arith.addf %11, %10 : vector<16x128xf32>
    %13 = arith.mulf %7, %12 : vector<16x128xf32>
    %c0_8 = arith.constant 0 : index
    %c0_9 = arith.constant 0 : index
    %14 = vector.load %arg4[%c0_8, %c0_9] : memref<16x128xf32, #tpu.memory_space<vmem>>, vector<16x128xf32>
    tpu.vector_store %arg4[%c0_8, %c0_9], %13 {strides = array<i32>} : memref<16x128xf32, #tpu.memory_space<vmem>>, vector<16x128xf32>,
    return
  }
  func.func @transform_0(%arg0: i32) -> (i32, i32) {
    %c0_i32 = arith.constant 0 : i32
    %c0_i32_0 = arith.constant 0 : i32
    return %arg0, %c0_i32 : i32, i32
  }
  func.func @transform_1(%arg0: i32) -> (i32, i32) {
    %c0_i32 = arith.constant 0 : i32
    %c0_i32_0 = arith.constant 0 : i32
    %c0_i32_1 = arith.constant 0 : i32
    return %c0_i32, %c0_i32_0 : i32, i32
  }
  func.func @transform_2(%arg0: i32) -> (i32, i32) {
    %c0_i32 = arith.constant 0 : i32
    %c0_i32_0 = arith.constant 0 : i32
    %c0_i32_1 = arith.constant 0 : i32
    return %c0_i32, %c0_i32_0 : i32, i32
  }
  func.func @transform_3(%arg0: i32) -> (i32, i32) {
    %c0_i32 = arith.constant 0 : i32
    %c0_i32_0 = arith.constant 0 : i32
    return %arg0, %c0_i32 : i32, i32
  }
}

</mosaic_0001>

<llo_original>
// kernel: tpu_custom_call.1
$region0: #{tpu_custom_call.1}
  #allocation0 [shape = 'u32[]', space=smem, size = 0x4, offset = 0x4, fixed_abs, tag = 'smem constant byte address 0x4 - core index']
  #allocation1 [shape = 'u32[144,128]{1,0:T(1,128)}', space=vmem, size = 0x12000, scoped, tag = 'internal scratch']
  %s0 = inlined_call_operand.hbm [shape: f32[16,32], index: 0, kind: input, shape index: {}]
  %s1 = inlined_call_operand.hbm [shape: f32[32,128], index: 1, kind: input, shape index: {}]
  %s2 = inlined_call_operand.vmem [shape: f32[1,128], index: 2, kind: input, shape index: {}]
  %s3 = inlined_call_operand.hbm [shape: f32[16,128], index: 3, kind: output, shape index: {}]
  %s4 = sld [smem:[#allocation0]]
  $region30: #{tpu_custom_call.1} parent=0
    _
  %s6 = ssub.s32 1, %s4
  %s7 = scalar_select 0, %s6, %s4
  $region1: #{tpu_custom_call.1} parent=0
    #allocation2 [shape = 'u8[8192]{0}', space=vmem, size = 0x2000, scoped, tag = 'input window, operand 0, single buffered']
    #allocation3 [shape = 's32[1]{0}', space=sflag, size = 0x4, scoped, tag = 'scoped memory for tpu_custom_call.1']
    #allocation4 [shape = 's32[1]{0}', space=sflag, size = 0x4, scoped, tag = 'scoped memory for tpu_custom_call.1']
    #allocation5 [shape = 'u8[16384]{0}', space=vmem, size = 0x4000, scoped, tag = 'input window, operand 1, single buffered']
    #allocation6 [shape = 's32[1]{0}', space=sflag, size = 0x4, scoped, tag = 'scoped memory for tpu_custom_call.1']
    #allocation7 [shape = 'u8[8192]{0}', space=vmem, size = 0x2000, scoped, tag = 'output window, operand 0, single buffered']
    %8 = vsyncpa [#allocation3], 0
    %9 = vsyncpa [#allocation6], 0
    %10 = vsyncpa [#allocation4], 0
    // Predicated region
    $region2: #{tpu_custom_call.1} parent=1 // pred_check
      _
    $region3: #{tpu_custom_call.1} parent=1 // pred_check_branch
      %12 = sbr.rel (0) target = $region5
    $region4: #{tpu_custom_call.1} parent=1 // pred_region
      %s14 = ssub.s32 256, 256
      %15 = vsyncadd [#allocation3], %s14
      %s16 = sshll.u32 [#allocation2], 4
      %s17 = int_to_ptr.vmem [resolvable:$true] %s16
      %22 = dma.hbm_to_vmem [thread:$0]  %s0, 256, %s17, [#allocation3], 128, 128, 8
    $region5: #{tpu_custom_call.1} parent=1 // pred_fallthru
      _
    // Predicated region
    $region6: #{tpu_custom_call.1} parent=1 // pred_check
      _
    $region7: #{tpu_custom_call.1} parent=1 // pred_check_branch
      %24 = sbr.rel (0) target = $region9
    $region8: #{tpu_custom_call.1} parent=1 // pred_region
      %s26 = ssub.s32 512, 512
      %27 = vsyncadd [#allocation6], %s26
      %s28 = sshll.u32 [#allocation5], 4
      %s29 = int_to_ptr.vmem [resolvable:$true] %s28
      %34 = dma.hbm_to_vmem [thread:$0]  %s1, 512, %s29, [#allocation6], 128, 128, 8
    $region9: #{tpu_custom_call.1} parent=1 // pred_fallthru
      _
    // Predicated region
    $region10: #{tpu_custom_call.1} parent=1 // pred_check
      _
    $region11: #{tpu_custom_call.1} parent=1 // pred_check_branch
      %36 = sbr.rel (0) target = $region13
    $region12: #{tpu_custom_call.1} parent=1 // pred_region
      _
    $region13: #{tpu_custom_call.1} parent=1 // pred_fallthru
      _
    // Predicated region
    $region14: #{tpu_custom_call.1} parent=1 // pred_check
      _
    $region15: #{tpu_custom_call.1} parent=1 // pred_check_branch
      %38 = sbr.rel (0) target = $region17
    $region16: #{tpu_custom_call.1} parent=1 // pred_region
      %39 = dma.done [#allocation3], 256
    $region17: #{tpu_custom_call.1} parent=1 // pred_fallthru
      _
    // Predicated region
    $region18: #{tpu_custom_call.1} parent=1 // pred_check
      _
    $region19: #{tpu_custom_call.1} parent=1 // pred_check_branch
      %41 = sbr.rel (0) target = $region21
    $region20: #{tpu_custom_call.1} parent=1 // pred_region
      %42 = dma.done [#allocation6], 512
    $region21: #{tpu_custom_call.1} parent=1 // pred_fallthru
      _
    %v43 = vld [vmem:[#allocation2] sm:$0xff]
    %v44 = vld [vmem:[#allocation2 + $0x8] sm:$0xff]
    %v45 = vld [vmem:[#allocation5] sm:$0xff]
    %v46 = vld [vmem:[#allocation5 + $0x8] sm:$0xff]
    %v47 = vld [vmem:[#allocation5 + $0x10] sm:$0xff]
    %v48 = vld [vmem:[#allocation5 + $0x18] sm:$0xff]
    %v49 = vld [vmem:[%s2] sm:$0x1]
    %v51 = vlaneseq
    %v52 = vshrl.u32 %v51, 7
    %v53 = vsub.s32 0, %v52
    %v54 = vrot.slane %v49, %v53
    %vm56 = vcmask 261120
    %v58 = vsel %vm56, %v43, 0
    %v61 = vsel %vm56, %v44, 0
    %63 = vmatprep.subr.mxu0 0.0
    %64 = vmatpush1.msra.mxu0 %v45
    %65 = vmatprep.subr.mxu0 0.0
    %66 = vmatpush1.msra.mxu0 %v46
    %67 = vmatprep.subr.mxu0 0.0
    %68 = vmatpush1.msra.mxu0 %v47
    %69 = vmatprep.subr.mxu0 0.0
    %70 = vmatpush1.msra.mxu0 %v48
    %71 = vmatprep.subr.mxu0 0.0
    %72 = vmatpush1.msra.mxu0 0.0
    %73 = vmatprep.subr.mxu0 0.0
    %74 = vmatpush1.msra.mxu0 0.0
    %75 = vmatprep.subr.mxu0 0.0
    %76 = vmatpush1.msra.mxu0 0.0
    %77 = vmatprep.subr.mxu0 0.0
    %78 = vmatpush1.msra.mxu0 0.0
    %79 = vmatprep.subr.mxu0 0.0
    %80 = vmatpush1.msra.mxu0 0.0
    %81 = vmatprep.subr.mxu0 0.0
    %82 = vmatpush1.msra.mxu0 0.0
    %83 = vmatprep.subr.mxu0 0.0
    %84 = vmatpush1.msra.mxu0 0.0
    %85 = vmatprep.subr.mxu0 0.0
    %86 = vmatpush1.msra.mxu0 0.0
    %87 = vmatprep.subr.mxu0 0.0
    %88 = vmatpush1.msra.mxu0 0.0
    %89 = vmatprep.subr.mxu0 0.0
    %90 = vmatpush1.msra.mxu0 0.0
    %91 = vmatprep.subr.mxu0 0.0
    %92 = vmatpush1.msra.mxu0 0.0
    %93 = vmatprep.subr.mxu0 0.0
    %94 = vmatpush1.msra.mxu0 0.0
    %95 = vmatprep.subr.mxu0 0.0
    %96 = vmatpush1.msra.mxu0 0.0
    %97 = vmatprep.subr.mxu0 0.0
    %98 = vmatpush1.msra.mxu0 0.0
    %99 = vmatprep.subr.mxu0 0.0
    %100 = vmatpush1.msra.mxu0 0.0
    %101 = vmatprep.subr.mxu0 0.0
    %102 = vmatpush1.msra.mxu0 0.0
    %103 = vmatprep.subr.mxu0 0.0
    %104 = vmatpush1.msra.mxu0 0.0
    %105 = vmatprep.subr.mxu0 0.0
    %106 = vmatpush1.msra.mxu0 0.0
    %107 = vmatprep.subr.mxu0 0.0
    %108 = vmatpush1.msra.mxu0 0.0
    %109 = vmatprep.subr.mxu0 0.0
    %110 = vmatpush1.msra.mxu0 0.0
    %111 = vmatprep.subr.mxu0 0.0
    %112 = vmatpush1.msra.mxu0 0.0
    %113 = vmatprep.subr.mxu0 0.0
    %114 = vmatpush1.msra.mxu0 0.0
    %115 = vmatprep.subr.mxu0 0.0
    %116 = vmatpush1.msra.mxu0 0.0
    %117 = vmatprep.subr.mxu0 0.0
    %118 = vmatpush1.msra.mxu0 0.0
    %119 = vmatprep.subr.mxu0 0.0
    %120 = vmatpush1.msra.mxu0 0.0
    %121 = vmatprep.subr.mxu0 0.0
    %122 = vmatpush1.msra.mxu0 0.0
    %123 = vmatprep.subr.mxu0 0.0
    %124 = vmatpush1.msra.mxu0 0.0
    %125 = vmatprep.subr.mxu0 0.0
    %126 = vmatpush1.msra.mxu0 0.0
    %127 = vmatprep.mubr.f32.mxu0 0.0
    %128 = vmatmul.mubr.f32.gmra.mrb[0].mxu0 %v58
    %v129 = vpop.f32.mrb[0].mxu0
    %v130 = vadd.f32 %v54, %v129
    %v131 = vpop.f32.mrb[0].mxu0
    %132 = vmatprep.mubr.f32.mxu0 0.0
    %133 = vmatmul.mubr.f32.gmra.mrb[0].mxu0 %v61
    %v134 = vpop.f32.mrb[0].mxu0
    %v135 = vadd.f32 %v54, %v134
    %v136 = vpop.f32.mrb[0].mxu0
    %137 = vdwg.mxu0
    %v138 = vmul.f32 %v130, 0.5
    %v139 = vmul.f32 %v135, 0.5
    %v140 = vmul.f32 %v130, 0.70710677
    %v141 = vmul.f32 %v135, 0.70710677
    %v142 = verf.f32.pop %v140
    %v143 = verf.f32.pop %v141
    %v144 = vadd.f32 %v142, 1.0
    %v145 = vadd.f32 %v143, 1.0
    %v146 = vmul.f32 %v138, %v144
    %v147 = vmul.f32 %v139, %v145
    %148 = vst [vmem:[#allocation7] sm:$0xff] %v146
    %149 = vst [vmem:[#allocation7 + $0x8] sm:$0xff] %v147
    // Predicated region
    $region22: #{tpu_custom_call.1} parent=1 // pred_check
      _
    $region23: #{tpu_custom_call.1} parent=1 // pred_check_branch
      %151 = sbr.rel (0) target = $region25
    $region24: #{tpu_custom_call.1} parent=1 // pred_region
      %s153 = ssub.s32 256, 256
      %154 = vsyncadd [#allocation4], %s153
      %s155 = sshll.u32 [#allocation7], 4
      %s156 = int_to_ptr.vmem [resolvable:$true] %s155
      %161 = dma.vmem_to_hbm [thread:$0]  %s156, 256, %s3, [#allocation4], 128, 128, 8
    $region25: #{tpu_custom_call.1} parent=1 // pred_fallthru
      _
    // Predicated region
    $region26: #{tpu_custom_call.1} parent=1 // pred_check
      _
    $region27: #{tpu_custom_call.1} parent=1 // pred_check_branch
      %163 = sbr.rel (0) target = $region29
    $region28: #{tpu_custom_call.1} parent=1 // pred_region
      %164 = dma.done [#allocation4], 256
    $region29: #{tpu_custom_call.1} parent=1 // pred_fallthru
      _
    %165 = vsyncpa [#allocation3], 1
    %166 = vsyncpa [#allocation6], 1
    %167 = vsyncpa [#allocation4], 1

</llo_original>
